<compile_context>
chip_gen: v7x
topology: tpu7x:2x2x1
jax: 0.10.0
libtpu: 0.0.40
codegen_flags: <defaults>
</compile_context>

<pallas_src>
import functools
import math

import jax
import jax.numpy as jnp
from jax.experimental import pallas as pl
from jax.experimental.pallas import tpu as pltpu

MIN_VALUE = -1.0
MAX_VALUE = 1.0
NUM_BINS = 128
BIN_STD_RATIO = 0.75
BIN_WIDTH = (MAX_VALUE - MIN_VALUE) / NUM_BINS
SIGMA = BIN_WIDTH * BIN_STD_RATIO          # bin_std_ratio is not None -> overrides sigma
INV_SQRT2_SIGMA = 1.0 / (math.sqrt(2.0) * SIGMA)


def _hl_gauss_kernel(target_ref, logits_ref, out_ref, *, total_batch):
    tb = target_ref.shape[0]
    nb = logits_ref.shape[1]

    inv = jnp.float32(INV_SQRT2_SIGMA)

    # --- bin upper edges generated in-kernel: sup_hi[j] = MIN + (j+1)*BIN_WIDTH ---
    lane_ids = jax.lax.broadcasted_iota(jnp.int32, (1, nb), 1)                 # (1, NB)
    sup_hi = (jnp.float32(MIN_VALUE)
              + (lane_ids.astype(jnp.float32) + 1.0) * jnp.float32(BIN_WIDTH))
    sup_hi_scaled = sup_hi * inv                                               # (1, NB)

    # --- transform_to_probs (erf-based soft binning): NB + 2 erfs per row ---
    t = jnp.clip(target_ref[...].astype(jnp.float32), MIN_VALUE, MAX_VALUE)    # (TB, 1)
    t_scaled = t * inv                                                         # (TB, 1)

    cdf_hi = jax.lax.erf(sup_hi_scaled - t_scaled)                             # (TB, NB)
    cdf_first = jax.lax.erf(jnp.float32(MIN_VALUE) * inv - t_scaled)           # (TB, 1)
    cdf_last = jax.lax.erf(jnp.float32(MAX_VALUE) * inv - t_scaled)            # (TB, 1)

    # cdf_lo[:, j] = cdf_hi[:, j-1] for j >= 1, cdf_lo[:, 0] = erf((MIN - t)*inv)
    rolled = pltpu.roll(cdf_hi, shift=1, axis=1)                               # (TB, NB) on XLU
    cdf_lo = jnp.where(lane_ids == 0, cdf_first, rolled)                       # (TB, NB)

    diff = cdf_hi - cdf_lo                                                     # unnormalized probs
    z = cdf_last - cdf_first                                                   # (TB, 1)

    # --- cross entropy with soft targets, folded:  loss = lse - (diff . logits) / z ---
    logits = logits_ref[...].astype(jnp.float32)                               # (TB, NB)
    m = jnp.max(logits, axis=-1, keepdims=True)                                # (TB, 1)
    lse = m + jnp.log(jnp.sum(jnp.exp(logits - m), axis=-1, keepdims=True))    # (TB, 1)
    wsum = jnp.sum(diff * logits, axis=-1, keepdims=True)                      # (TB, 1)
    per_row = lse - wsum / z                                                   # (TB, 1)

    # mask out padded rows (general B)
    row = jax.lax.broadcasted_iota(jnp.int32, (tb, 1), 0) + pl.program_id(0) * tb
    per_row = jnp.where(row < total_batch, per_row, jnp.float32(0.0))

    tile_sum = jnp.sum(per_row, axis=0, keepdims=True)                         # (1, 1)
    # every grid step owns its own (8,128)-aligned block; broadcast the tile scalar into it
    out_ref[...] = jnp.broadcast_to(tile_sum, out_ref.shape)


def hl_gauss_loss(logits, target, *, batch_tile=512):
    """logits: (B, NUM_BINS) float, target: (B,) float -> scalar f32 mean CE loss."""
    B, NB = logits.shape
    assert NB == NUM_BINS

    # tile size: multiple of 8 sublanes, no bigger than needed, capped by batch_tile
    bt = min(batch_tile, -(-B // 8) * 8)
    bt = max(8, -(-bt // 8) * 8)
    num_tiles = -(-B // bt)
    B_pad = num_tiles * bt

    logits = logits.astype(jnp.float32)
    target = target.astype(jnp.float32)
    if B_pad != B:
        logits = jnp.pad(logits, ((0, B_pad - B), (0, 0)))
        target = jnp.pad(target, (0, B_pad - B))
    target2d = target.reshape(B_pad, 1)

    partials = pl.pallas_call(
        functools.partial(_hl_gauss_kernel, total_batch=B),
        out_shape=jax.ShapeDtypeStruct((8, num_tiles * 128), jnp.float32),
        grid=(num_tiles,),
        in_specs=[
            pl.BlockSpec((bt, 1), lambda b: (b, 0)),          # target
            pl.BlockSpec((bt, NUM_BINS), lambda b: (b, 0)),   # logits
        ],
        # one private, fully (8,128)-aligned output block per grid step -> no revisiting
        out_specs=pl.BlockSpec((8, 128), lambda b: (0, b)),
        compiler_params=pltpu.CompilerParams(
            dimension_semantics=("parallel",),                # independent tiles (megacore on v7x)
        ),
    )(target2d, logits)

    # reduction='mean': lane 0 / row 0 of each tile's block carries that tile's partial sum
    tile_sums = partials[0].reshape(num_tiles, 128)[:, 0]
    return jnp.sum(tile_sums) / jnp.float32(B)


def _reference(logits, target):
    """Pure-JAX reference mirroring the PyTorch module."""
    support = jnp.linspace(MIN_VALUE, MAX_VALUE, NUM_BINS + 1, dtype=jnp.float32)
    t = jnp.clip(target, MIN_VALUE, MAX_VALUE)
    cdf = jax.lax.erf((support[None, :] - t[:, None]) / jnp.float32(math.sqrt(2.0) * SIGMA))
    z = cdf[..., -1] - cdf[..., 0]
    probs = (cdf[..., 1:] - cdf[..., :-1]) / z[:, None]
    log_sm = jax.nn.log_softmax(logits, axis=-1)
    return jnp.mean(-jnp.sum(probs * log_sm, axis=-1))


if __name__ == "__main__":
    key = jax.random.PRNGKey(0)
    k1, k2 = jax.random.split(key)
    B = 20
    logits = jax.random.normal(k1, (B, NUM_BINS), dtype=jnp.float32)
    target = jax.random.uniform(k2, (B,), dtype=jnp.float32,
                                minval=-1.2, maxval=1.2)   # exercises the clamp

    # default path: single padded tile (exercises padding + in-kernel row masking)
    loss = hl_gauss_loss(logits, target)
    # multi-tile path: 3 tiles of 8 rows (exercises the parallel grid + per-tile outputs)
    loss_mt = hl_gauss_loss(logits, target, batch_tile=8)
    jax.block_until_ready((loss, loss_mt))

    ref = _reference(logits, target)
    assert jnp.allclose(loss, ref, rtol=1e-4, atol=1e-4), (loss, ref)
    assert jnp.allclose(loss_mt, ref, rtol=1e-4, atol=1e-4), (loss_mt, ref)
    print("KERNEL_OK")
</pallas_src>

<mosaic_0001>
module attributes {stable_mosaic.version = 11 : i64} {
  func.func @_hl_gauss_kernel(%arg0: i32, %arg1: memref<24x1xf32, #tpu.memory_space<vmem>>, %arg2: memref<24x128xf32, #tpu.memory_space<vmem>>, %arg3: memref<8x128xf32, #tpu.memory_space<vmem>>) attributes {dimension_semantics = [#tpu.dimension_semantics<parallel>], iteration_bounds = array<i64: 1>, scalar_prefetch = 0 : i64, scratch_operands = 0 : i64, tpu.core_type = #tpu.core_type<tc>, window_params = [{transform_indices = @transform_0, window_bounds = array<i64: 24, 1>}, {transform_indices = @transform_1, window_bounds = array<i64: 24, 128>}, {transform_indices = @transform_2, window_bounds = array<i64: 8, 128>}]} {
    %0 = tpu.iota {dimensions = array<i32: 1>} : vector<1x128xi32>
    %1 = arith.sitofp %0 : vector<1x128xi32> to vector<1x128xf32>
    %cst = arith.constant 1.000000e+00 : f32
    %2 = vector.broadcast %cst : f32 to vector<1x128xf32>
    %3 = arith.addf %1, %2 : vector<1x128xf32>
    %cst_0 = arith.constant 1.562500e-02 : f32
    %4 = vector.broadcast %cst_0 : f32 to vector<1x128xf32>
    %5 = arith.mulf %3, %4 : vector<1x128xf32>
    %cst_1 = arith.constant -1.000000e+00 : f32
    %6 = vector.broadcast %cst_1 : f32 to vector<1x128xf32>
    %7 = arith.addf %6, %5 : vector<1x128xf32>
    %cst_2 = arith.constant 60.3397789 : f32
    %8 = vector.broadcast %cst_2 : f32 to vector<1x128xf32>
    %9 = arith.mulf %7, %8 : vector<1x128xf32>
    %c0 = arith.constant 0 : index
    %c0_3 = arith.constant 0 : index
    %10 = vector.load %arg1[%c0, %c0_3] : memref<24x1xf32, #tpu.memory_space<vmem>>, vector<24x1xf32>
    %cst_4 = arith.constant -1.000000e+00 : f32
    %cst_5 = arith.constant 1.000000e+00 : f32
    %11 = vector.broadcast %cst_4 : f32 to vector<24x1xf32>
    %12 = arith.maximumf %11, %10 : vector<24x1xf32>
    %13 = vector.broadcast %cst_5 : f32 to vector<24x1xf32>
    %14 = arith.minimumf %13, %12 : vector<24x1xf32>
    %cst_6 = arith.constant 60.3397789 : f32
    %15 = vector.broadcast %cst_6 : f32 to vector<24x1xf32>
    %16 = arith.mulf %14, %15 : vector<24x1xf32>
    %17 = vector.broadcast %9 : vector<1x128xf32> to vector<24x128xf32>
    %18 = vector.broadcast %16 : vector<24x1xf32> to vector<24x128xf32>
    %19 = arith.subf %17, %18 : vector<24x128xf32>
    %20 = math.erf %19 : vector<24x128xf32>
    %cst_7 = arith.constant -1.000000e+00 : f32
    %cst_8 = arith.constant 60.3397789 : f32
    %21 = arith.mulf %cst_7, %cst_8 : f32
    %22 = vector.broadcast %21 : f32 to vector<24x1xf32>
    %23 = arith.subf %22, %16 : vector<24x1xf32>
    %24 = math.erf %23 : vector<24x1xf32>
    %cst_9 = arith.constant 1.000000e+00 : f32
    %cst_10 = arith.constant 60.3397789 : f32
    %25 = arith.mulf %cst_9, %cst_10 : f32
    %26 = vector.broadcast %25 : f32 to vector<24x1xf32>
    %27 = arith.subf %26, %16 : vector<24x1xf32>
    %28 = math.erf %27 : vector<24x1xf32>
    %c1_i32 = arith.constant 1 : i32
    %29 = tpu.dynamic_rotate %20 by %c1_i32 dim 1 : vector<24x128xf32>, i32 -> vector<24x128xf32>
    %c0_i32 = arith.constant 0 : i32
    %30 = vector.broadcast %c0_i32 : i32 to vector<1x128xi32>
    %31 = arith.cmpi eq, %0, %30 : vector<1x128xi32>
    %32 = vector.shape_cast %31 : vector<1x128xi1> to vector<1x128xi1>
    %33 = vector.broadcast %32 : vector<1x128xi1> to vector<24x128xi1>
    %34 = vector.shape_cast %24 : vector<24x1xf32> to vector<24x1xf32>
    %35 = vector.broadcast %34 : vector<24x1xf32> to vector<24x128xf32>
    %36 = arith.select %33, %35, %29 : vector<24x128xi1>, vector<24x128xf32>
    %37 = arith.subf %20, %36 : vector<24x128xf32>
    %38 = arith.subf %28, %24 : vector<24x1xf32>
    %c0_11 = arith.constant 0 : index
    %c0_12 = arith.constant 0 : index
    %39 = vector.load %arg2[%c0_11, %c0_12] : memref<24x128xf32, #tpu.memory_space<vmem>>, vector<24x128xf32>
    %cst_13 = arith.constant dense<0xFF800000> : vector<24xf32>
    %40 = vector.multi_reduction <maximumf>, %39, %cst_13 [1] : vector<24x128xf32> to vector<24xf32>
    %41 = vector.shape_cast %40 : vector<24xf32> to vector<24x1xf32>
    %42 = vector.broadcast %41 : vector<24x1xf32> to vector<24x128xf32>
    %43 = arith.subf %39, %42 : vector<24x128xf32>
    %44 = math.exp %43 : vector<24x128xf32>
    %cst_14 = arith.constant dense<0.000000e+00> : vector<24xf32>
    %45 = vector.multi_reduction <add>, %44, %cst_14 [1] : vector<24x128xf32> to vector<24xf32>
    %46 = vector.shape_cast %45 : vector<24xf32> to vector<24x1xf32>
    %47 = math.log %46 : vector<24x1xf32>
    %48 = arith.addf %41, %47 : vector<24x1xf32>
    %49 = arith.mulf %37, %39 : vector<24x128xf32>
    %cst_15 = arith.constant dense<0.000000e+00> : vector<24xf32>
    %50 = vector.multi_reduction <add>, %49, %cst_15 [1] : vector<24x128xf32> to vector<24xf32>
    %51 = vector.shape_cast %50 : vector<24xf32> to vector<24x1xf32>
    %52 = arith.divf %51, %38 : vector<24x1xf32>
    %53 = arith.subf %48, %52 : vector<24x1xf32>
    %54 = tpu.iota {dimensions = array<i32: 0>} : vector<24x1xi32>
    %c24_i32 = arith.constant 24 : i32
    %55 = arith.muli %arg0, %c24_i32 : i32
    %56 = vector.broadcast %55 : i32 to vector<24x1xi32>
    %57 = arith.addi %54, %56 : vector<24x1xi32>
    %c20_i32 = arith.constant 20 : i32
    %58 = vector.broadcast %c20_i32 : i32 to vector<24x1xi32>
    %59 = arith.cmpi slt, %57, %58 : vector<24x1xi32>
    %cst_16 = arith.constant 0.000000e+00 : f32
    %60 = vector.broadcast %cst_16 : f32 to vector<24x1xf32>
    %61 = arith.select %59, %53, %60 : vector<24x1xi1>, vector<24x1xf32>
    %cst_17 = arith.constant dense<0.000000e+00> : vector<1xf32>
    %62 = vector.multi_reduction <add>, %61, %cst_17 [0] : vector<24x1xf32> to vector<1xf32>
    %63 = vector.shape_cast %62 : vector<1xf32> to vector<1x1xf32>
    %64 = vector.shape_cast %63 : vector<1x1xf32> to vector<1x1xf32>
    %65 = vector.broadcast %64 : vector<1x1xf32> to vector<8x128xf32>
    %c0_18 = arith.constant 0 : index
    %c0_19 = arith.constant 0 : index
    %66 = vector.load %arg3[%c0_18, %c0_19] : memref<8x128xf32, #tpu.memory_space<vmem>>, vector<8x128xf32>
    tpu.vector_store %arg3[%c0_18, %c0_19], %65 {strides = array<i32>} : memref<8x128xf32, #tpu.memory_space<vmem>>, vector<8x128xf32>,
    return
  }
  func.func @transform_0(%arg0: i32) -> (i32, i32) {
    %c0_i32 = arith.constant 0 : i32
    %c0_i32_0 = arith.constant 0 : i32
    return %arg0, %c0_i32 : i32, i32
  }
  func.func @transform_1(%arg0: i32) -> (i32, i32) {
    %c0_i32 = arith.constant 0 : i32
    %c0_i32_0 = arith.constant 0 : i32
    return %arg0, %c0_i32 : i32, i32
  }
  func.func @transform_2(%arg0: i32) -> (i32, i32) {
    %c0_i32 = arith.constant 0 : i32
    %c0_i32_0 = arith.constant 0 : i32
    return %c0_i32, %arg0 : i32, i32
  }
}

</mosaic_0001>

<llo_original>
// kernel: tpu_custom_call.1
$region0: #{tpu_custom_call.1}
  #allocation0 [shape = 'u32[]', space=smem, size = 0x4, offset = 0x4, fixed_abs, tag = 'smem constant byte address 0x4 - core index']
  #allocation1 [shape = 'u32[144,128]{1,0:T(1,128)}', space=vmem, size = 0x12000, scoped, tag = 'internal scratch']
  %s0 = inlined_call_operand.vmem [shape: f32[24,1], index: 0, kind: input, shape index: {}]
  %s1 = inlined_call_operand.vmem [shape: f32[24,128], index: 1, kind: input, shape index: {}]
  %s2 = inlined_call_operand.hbm [shape: f32[8,128], index: 2, kind: output, shape index: {}]
  %s3 = sld [smem:[#allocation0]]
  $region18: #{tpu_custom_call.1} parent=0
    _
  %s5 = ssub.s32 1, %s3
  %s6 = scalar_select 0, %s5, %s3
  $region1: #{tpu_custom_call.1} parent=0
    #allocation2 [shape = 'u8[4096]{0}', space=vmem, size = 0x1000, scoped, tag = 'output window, operand 0, single buffered']
    #allocation3 [shape = 's32[1]{0}', space=sflag, size = 0x4, scoped, tag = 'scoped memory for tpu_custom_call.1']
    %7 = vsyncpa [#allocation3], 0
    // Predicated region
    $region2: #{tpu_custom_call.1} parent=1 // pred_check
      _
    $region3: #{tpu_custom_call.1} parent=1 // pred_check_branch
      %9 = sbr.rel (0) target = $region5
    $region4: #{tpu_custom_call.1} parent=1 // pred_region
      _
    $region5: #{tpu_custom_call.1} parent=1 // pred_fallthru
      _
    // Predicated region
    $region6: #{tpu_custom_call.1} parent=1 // pred_check
      _
    $region7: #{tpu_custom_call.1} parent=1 // pred_check_branch
      %11 = sbr.rel (0) target = $region9
    $region8: #{tpu_custom_call.1} parent=1 // pred_region
      _
    $region9: #{tpu_custom_call.1} parent=1 // pred_fallthru
      _
    %v12 = vlaneseq
    %v13 = vand.u32 %v12, 127
    %v14 = vcvt.s32.f32 %v13
    %v15 = vadd.f32 %v14, 1.0
    %v16 = vmul.f32 %v15, 0.015625
    %v17 = vadd.f32 %v16, -1.0
    %v18 = vmul.f32 %v17, 60.33978
    %v19 = vld [vmem:[%s0] sm:$0xff]
    %v20 = vld [vmem:[%s0 + $0x8] sm:$0xff]
    %v21 = vld [vmem:[%s0 + $0x10] sm:$0xff]
    %v22 = vmax.f32 %v19, -1.0
    %v23 = vmax.f32 %v20, -1.0
    %v24 = vmax.f32 %v21, -1.0
    %v25 = vmin.f32 %v22, 1.0
    %v26 = vmin.f32 %v23, 1.0
    %v27 = vmin.f32 %v24, 1.0
    %v28 = vmul.f32 %v25, 60.33978
    %v29 = vmul.f32 %v26, 60.33978
    %v30 = vmul.f32 %v27, 60.33978
    %32 = vset.pattern.permute.xlu0 0
    %33 = vperm.xlu0 %32, %v28
    %v34 = vpop.permute.xlu0 %33
    %37 = vset.pattern.permute.xlu0 0
    %38 = vperm.xlu0 %37, %v29
    %v39 = vpop.permute.xlu0 %38
    %42 = vset.pattern.permute.xlu0 0
    %43 = vperm.xlu0 %42, %v30
    %v44 = vpop.permute.xlu0 %43
    %v46 = vsub.f32 %v18, %v34
    %v47 = vsub.f32 %v18, %v39
    %v48 = vsub.f32 %v18, %v44
    %v49 = verf.f32.pop %v46
    %v50 = verf.f32.pop %v47
    %v51 = verf.f32.pop %v48
    %v52 = vsub.f32 -60.33978, %v28
    %v53 = vsub.f32 -60.33978, %v29
    %v54 = vsub.f32 -60.33978, %v30
    %v55 = verf.f32.pop %v52
    %v56 = verf.f32.pop %v53
    %v57 = verf.f32.pop %v54
    %v58 = vsub.f32 60.33978, %v28
    %v59 = vsub.f32 60.33978, %v29
    %v60 = vsub.f32 60.33978, %v30
    %v61 = verf.f32.pop %v58
    %v62 = verf.f32.pop %v59
    %v63 = verf.f32.pop %v60
    %64 = vrot.lane.b32.xlu0 %v49, 1
    %v65 = vpop.permute.xlu0 %64
    %66 = vrot.lane.b32.xlu0 %v50, 1
    %v67 = vpop.permute.xlu0 %66
    %68 = vrot.lane.b32.xlu0 %v51, 1
    %v69 = vpop.permute.xlu0 %68
    %vm70 = vcmp.eq.s32.totalorder %v13, 0
    %v71 = vsel %vm70, 1, 0
    %vm72 = vcmp.eq.s32.totalorder %v71, 1
    %74 = vset.pattern.permute.xlu0 0
    %75 = vperm.xlu0 %74, %v55
    %v76 = vpop.permute.xlu0 %75
    %79 = vset.pattern.permute.xlu0 0
    %80 = vperm.xlu0 %79, %v56
    %v81 = vpop.permute.xlu0 %80
    %84 = vset.pattern.permute.xlu0 0
    %85 = vperm.xlu0 %84, %v57
    %v86 = vpop.permute.xlu0 %85
    %v88 = vsel %vm72, %v76, %v65
    %v89 = vsel %vm72, %v81, %v67
    %v90 = vsel %vm72, %v86, %v69
    %v91 = vsub.f32 %v49, %v88
    %v92 = vsub.f32 %v50, %v89
    %v93 = vsub.f32 %v51, %v90
    %v94 = vsub.f32 %v61, %v55
    %v95 = vsub.f32 %v62, %v56
    %v96 = vsub.f32 %v63, %v57
    %v97 = vld [vmem:[%s1] sm:$0xff]
    %v98 = vld [vmem:[%s1 + $0x8] sm:$0xff]
    %v99 = vld [vmem:[%s1 + $0x10] sm:$0xff]
    %100 = vmax.xlane.f32.xlu0 %v97
    %v101 = vpop.xlane.xlu0 %100
    %102 = vmax.xlane.f32.xlu0 %v98
    %v103 = vpop.xlane.xlu0 %102
    %104 = vmax.xlane.f32.xlu0 %v99
    %v105 = vpop.xlane.xlu0 %104
    %v106 = vsub.f32 %v97, %v101
    %v107 = vsub.f32 %v98, %v103
    %v108 = vsub.f32 %v99, %v105
    %v109 = vmul.f32 %v106, 1.442695
    %v110 = vpow.pop %v109
    %v111 = vmul.f32 %v107, 1.442695
    %v112 = vpow.pop %v111
    %v113 = vmul.f32 %v108, 1.442695
    %v114 = vpow.pop %v113
    %115 = vadd.xlane.f32.xlu0 %v110
    %v116 = vpop.xlane.xlu0 %115
    %117 = vadd.xlane.f32.xlu0 %v112
    %v118 = vpop.xlane.xlu0 %117
    %119 = vadd.xlane.f32.xlu0 %v114
    %v120 = vpop.xlane.xlu0 %119
    %v121 = vlog2.pop %v116
    %v122 = vmul.f32 %v121, 0.6931472
    %v123 = vlog2.pop %v118
    %v124 = vmul.f32 %v123, 0.6931472
    %v125 = vlog2.pop %v120
    %v126 = vmul.f32 %v125, 0.6931472
    %v127 = vadd.f32 %v101, %v122
    %v128 = vadd.f32 %v103, %v124
    %v129 = vadd.f32 %v105, %v126
    %v130 = vmul.f32 %v91, %v97
    %v131 = vmul.f32 %v92, %v98
    %v132 = vmul.f32 %v93, %v99
    %133 = vadd.xlane.f32.xlu0 %v130
    %v134 = vpop.xlane.xlu0 %133
    %135 = vadd.xlane.f32.xlu0 %v131
    %v136 = vpop.xlane.xlu0 %135
    %137 = vadd.xlane.f32.xlu0 %v132
    %v138 = vpop.xlane.xlu0 %137
    %v139 = vrcp.pop %v94
    %v140 = vmul.f32 %v134, %v139
    %v141 = vrcp.pop %v95
    %v142 = vmul.f32 %v136, %v141
    %v143 = vrcp.pop %v96
    %v144 = vmul.f32 %v138, %v143
    %v145 = vsub.f32 %v127, %v140
    %v146 = vsub.f32 %v128, %v142
    %v147 = vsub.f32 %v129, %v144
    %v148 = vlaneseq
    %v149 = vshrl.u32 %v148, 7
    %v150 = vadd.s32 %v149, 8
    %v151 = vadd.s32 %v149, 16
    %s152 = smul.u32 0, 24
    %v153 = vstv %s152
    %v154 = vadd.s32 %v149, %v153
    %v155 = vadd.s32 %v150, %v153
    %v156 = vadd.s32 %v151, %v153
    %vm157 = vcmp.lt.s32.totalorder %v154, 20
    %vm158 = vcmp.lt.s32.totalorder %v155, 20
    %vm159 = vcmp.lt.s32.totalorder %v156, 20
    %v160 = vsel %vm157, %v145, 0.0
    %v161 = vsel %vm158, %v146, 0.0
    %v162 = vsel %vm159, %v147, 0.0
    %vm163 = vcmask 7168
    %v164 = vsel %vm163, %v160, 0.0
    %v165 = vsel %vm163, %v161, 0.0
    %v166 = vadd.f32 %v164, %v165
    %v167 = vsel %vm163, %v162, 0.0
    %v168 = vadd.f32 %v166, %v167
    %v169 = vrot.slane %v168, 4
    %v170 = vadd.f32 %v168, %v169
    %v171 = vrot.slane %v170, 2
    %v172 = vadd.f32 %v170, %v171
    %v173 = vrot.slane %v172, 1
    %v174 = vadd.f32 %v172, %v173
    %176 = vset.pattern.permute.xlu0 0
    %177 = vperm.xlu0 %176, %v174
    %v178 = vpop.permute.xlu0 %177
    %180 = vst [vmem:[#allocation2] sm:$0xff] %v178
    // Predicated region
    $region10: #{tpu_custom_call.1} parent=1 // pred_check
      _
    $region11: #{tpu_custom_call.1} parent=1 // pred_check_branch
      %182 = sbr.rel (0) target = $region13
    $region12: #{tpu_custom_call.1} parent=1 // pred_region
      %s184 = ssub.s32 128, 128
      %185 = vsyncadd [#allocation3], %s184
      %s187 = sshll.u32 [#allocation2], 4
      %s188 = int_to_ptr.vmem [resolvable:$true] %s187
      %190 = dma.vmem_to_hbm [thread:$0]  %s188, 128, %s2, [#allocation3]
    $region13: #{tpu_custom_call.1} parent=1 // pred_fallthru
      _
    // Predicated region
    $region14: #{tpu_custom_call.1} parent=1 // pred_check
      _
    $region15: #{tpu_custom_call.1} parent=1 // pred_check_branch
      %192 = sbr.rel (0) target = $region17
    $region16: #{tpu_custom_call.1} parent=1 // pred_region
      %193 = dma.done [#allocation3], 128
    $region17: #{tpu_custom_call.1} parent=1 // pred_fallthru
      _
    %194 = vsyncpa [#allocation3], 1

</llo_original>
